<compile_context>
chip_gen: v7x
topology: tpu7x:2x2x1
jax: 0.10.0
libtpu: 0.0.40
codegen_flags: <defaults>
</compile_context>

<pallas_src>
import functools

import jax
import jax.numpy as jnp
from jax.experimental import pallas as pl
from jax.experimental.pallas import tpu as pltpu


def _round_up(x, m):
    return (x + m - 1) // m * m


def _f1_focal_kernel(logits_ref, labels_ref, out_ref,
                     tp_acc, sump_acc, cnt_acc, focal_acc,
                     *, classes, total_n, epsilon, gamma, rate):
    i = pl.program_id(0)

    @pl.when(i == 0)
    def _init():
        tp_acc[...] = jnp.zeros_like(tp_acc)
        sump_acc[...] = jnp.zeros_like(sump_acc)
        cnt_acc[...] = jnp.zeros_like(cnt_acc)
        focal_acc[...] = jnp.zeros_like(focal_acc)

    logits = logits_ref[...].astype(jnp.float32)       # (C, T), N lane-dense
    labels = labels_ref[...]                           # (1, T) int32, -1 == padding
    c, t = logits.shape

    valid = (labels >= 0).astype(jnp.float32)                          # (1, T)
    row = jax.lax.broadcasted_iota(jnp.int32, (c, t), 0)
    y_true = (row == labels).astype(jnp.float32)                       # (C, T)

    # ---- numerically-stable softmax / log-softmax over the small class axis ----
    m = jnp.max(logits, axis=0, keepdims=True)                         # (1, T)
    shifted = logits - m
    ex = jnp.exp(shifted)
    denom = jnp.sum(ex, axis=0, keepdims=True)                         # (1, T)
    inv = pl.reciprocal(denom)                                         # exact recip (EUP)
    p = ex * inv                                                       # (C, T) softmax

    # ---- F1 partial sums (fp/fn recovered algebraically at finalize) ----
    tp_acc[...] += jnp.sum(y_true * p, axis=1, keepdims=True)          # (C, 1)
    sump_acc[...] += jnp.sum(p * valid, axis=1, keepdims=True)         # (C, 1)
    cnt_acc[...] += jnp.sum(y_true, axis=1, keepdims=True)             # (C, 1)

    # ---- Focal partial sum on true-class values only ----
    logp_true = (jnp.sum(shifted * y_true, axis=0, keepdims=True)
                 - jnp.log(denom))                                     # (1, T)
    p_true = jnp.sum(p * y_true, axis=0, keepdims=True)                # (1, T)
    one_minus = 1.0 - p_true
    g = float(gamma)
    if g == 2.0:                       # common case: single VPU multiply
        wfac = one_minus * one_minus
    elif g == int(g) and g >= 0:       # integer gamma: repeated multiplies
        wfac = jnp.ones_like(one_minus)
        for _ in range(int(g)):
            wfac = wfac * one_minus
    else:                              # general (EUP exp/log) fallback
        wfac = one_minus ** g
    focal_acc[...] += jnp.sum(wfac * logp_true * valid, axis=1, keepdims=True)

    @pl.when(i == pl.num_programs(0) - 1)
    def _finalize():
        tp = tp_acc[...]
        fp = sump_acc[...] - tp
        fn = cnt_acc[...] - tp
        precision = tp / (tp + fp + epsilon)
        recall = tp / (tp + fn + epsilon)
        f1 = 2.0 * (precision * recall) / (precision + recall + epsilon)
        f1 = jnp.clip(f1, epsilon, 1.0 - epsilon)
        f1_loss = 1.0 - jnp.sum(f1, axis=0, keepdims=True) / float(classes)   # (1, 1)
        focal_loss = -focal_acc[...] / float(total_n)                          # (1, 1)
        out_ref[...] = f1_loss * rate + focal_loss * (1.0 - rate)


def f1_focal_loss(preds, truth, *, classes=9, epsilon=1e-7, gamma=2.0,
                  f1rate=0.4, tile_n=None):
    """preds: (N, C) logits (any float dtype), truth: (N,) int labels. Returns scalar."""
    n, c = preds.shape
    assert c == classes
    if tile_n is None:
        # Large lane-dense tile over N; a (9, 16384) f32 tile is ~0.6 MiB, with the
        # handful of live temporaries + double-buffered inputs this stays far below
        # the scoped-VMEM limit on v5e/v6e/v7x while amortizing per-step overhead.
        tile_n = max(128, min(16384, _round_up(n, 128)))
    n_pad = _round_up(n, tile_n)
    pad = n_pad - n

    logits = preds                              # keep native dtype; cast in-kernel
    labels = truth.astype(jnp.int32)
    if pad:
        logits = jnp.concatenate(
            [logits, jnp.zeros((pad, c), logits.dtype)], axis=0)
        labels = jnp.concatenate(
            [labels, jnp.full((pad,), -1, jnp.int32)], axis=0)

    logits_t = logits.T                         # (C, n_pad): N on the lane axis
    labels2d = labels.reshape(1, n_pad)         # (1, n_pad): lane-dense labels

    kernel = functools.partial(
        _f1_focal_kernel, classes=classes, total_n=n, epsilon=epsilon,
        gamma=gamma, rate=f1rate)

    out = pl.pallas_call(
        kernel,
        out_shape=jax.ShapeDtypeStruct((1, 1), jnp.float32),
        grid_spec=pltpu.PrefetchScalarGridSpec(
            num_scalar_prefetch=0,
            grid=(n_pad // tile_n,),
            in_specs=[
                pl.BlockSpec((classes, tile_n), lambda i: (0, i)),
                pl.BlockSpec((1, tile_n), lambda i: (0, i)),
            ],
            out_specs=pl.BlockSpec((1, 1), lambda i: (0, 0)),
            scratch_shapes=[
                pltpu.VMEM((classes, 1), jnp.float32),   # tp
                pltpu.VMEM((classes, 1), jnp.float32),   # sum(p)  -> fp = sum(p) - tp
                pltpu.VMEM((classes, 1), jnp.float32),   # count   -> fn = count - tp
                pltpu.VMEM((1, 1), jnp.float32),         # focal running sum
            ]),
        compiler_params=pltpu.CompilerParams(
            dimension_semantics=("arbitrary",)),
    )(logits_t, labels2d)
    return out[0, 0]


def _reference(preds, truth, *, classes=9, epsilon=1e-7, gamma=2.0, f1rate=0.4):
    y_true = jax.nn.one_hot(truth, classes, dtype=jnp.float32)
    p = jax.nn.softmax(preds, axis=1)
    log_p = jax.nn.log_softmax(preds, axis=1)
    tp = jnp.sum(y_true * p, axis=0)
    fp = jnp.sum((1 - y_true) * p, axis=0)
    fn = jnp.sum(y_true * (1 - p), axis=0)
    precision = tp / (tp + fp + epsilon)
    recall = tp / (tp + fn + epsilon)
    f1 = 2 * precision * recall / (precision + recall + epsilon)
    f1 = jnp.clip(f1, epsilon, 1 - epsilon)
    f1_loss = 1 - jnp.mean(f1)
    mod = ((1 - p) ** gamma) * log_p
    focal = -jnp.mean(jnp.take_along_axis(mod, truth[:, None], axis=1))
    return f1_loss * f1rate + focal * (1 - f1rate)


if __name__ == "__main__":
    key = jax.random.PRNGKey(0)
    k1, k2 = jax.random.split(key)
    N, C = 8, 9
    preds = jax.random.normal(k1, (N, C), dtype=jnp.float32)
    truth = jax.random.randint(k2, (N,), 0, C, dtype=jnp.int32)

    loss = f1_focal_loss(preds, truth, classes=C)
    loss = jax.block_until_ready(loss)

    ref = _reference(preds, truth, classes=C)
    assert jnp.allclose(loss, ref, rtol=1e-5, atol=1e-5), (loss, ref)
    print("KERNEL_OK")
</pallas_src>

<mosaic_0001>
module attributes {stable_mosaic.version = 11 : i64} {
  func.func @_f1_focal_kernel(%arg0: i32, %arg1: memref<9x128xf32, #tpu.memory_space<vmem>>, %arg2: memref<1x128xi32, #tpu.memory_space<vmem>>, %arg3: memref<1x1xf32, #tpu.memory_space<vmem>>, %arg4: memref<9x1xf32, #tpu.memory_space<vmem>>, %arg5: memref<9x1xf32, #tpu.memory_space<vmem>>, %arg6: memref<9x1xf32, #tpu.memory_space<vmem>>, %arg7: memref<1x1xf32, #tpu.memory_space<vmem>>) attributes {dimension_semantics = [#tpu.dimension_semantics<arbitrary>], iteration_bounds = array<i64: 1>, scalar_prefetch = 0 : i64, scratch_operands = 4 : i64, tpu.core_type = #tpu.core_type<tc>, window_params = [{transform_indices = @transform_0, window_bounds = array<i64: 9, 128>}, {transform_indices = @transform_1, window_bounds = array<i64: 1, 128>}, {pipeline_mode = #tpu.pipeline_mode<synchronous>, transform_indices = @transform_2, window_bounds = array<i64: 1, 1>}]} {
    %c0_i32 = arith.constant 0 : i32
    %0 = arith.cmpi eq, %arg0, %c0_i32 : i32
    %1 = arith.extui %0 : i1 to i32
    %c0_i32_0 = arith.constant 0 : i32
    %2 = arith.cmpi ne, %1, %c0_i32_0 : i32
    scf.if %2 {
      %cst_31 = arith.constant 0.000000e+00 : f32
      %63 = vector.broadcast %cst_31 : f32 to vector<9x1xf32>
      %c0_32 = arith.constant 0 : index
      %c0_33 = arith.constant 0 : index
      %64 = vector.load %arg4[%c0_32, %c0_33] : memref<9x1xf32, #tpu.memory_space<vmem>>, vector<9x1xf32>
      tpu.vector_store %arg4[%c0_32, %c0_33], %63 {strides = array<i32>} : memref<9x1xf32, #tpu.memory_space<vmem>>, vector<9x1xf32>,
      %cst_34 = arith.constant 0.000000e+00 : f32
      %65 = vector.broadcast %cst_34 : f32 to vector<9x1xf32>
      %c0_35 = arith.constant 0 : index
      %c0_36 = arith.constant 0 : index
      %66 = vector.load %arg5[%c0_35, %c0_36] : memref<9x1xf32, #tpu.memory_space<vmem>>, vector<9x1xf32>
      tpu.vector_store %arg5[%c0_35, %c0_36], %65 {strides = array<i32>} : memref<9x1xf32, #tpu.memory_space<vmem>>, vector<9x1xf32>,
      %cst_37 = arith.constant 0.000000e+00 : f32
      %67 = vector.broadcast %cst_37 : f32 to vector<9x1xf32>
      %c0_38 = arith.constant 0 : index
      %c0_39 = arith.constant 0 : index
      %68 = vector.load %arg6[%c0_38, %c0_39] : memref<9x1xf32, #tpu.memory_space<vmem>>, vector<9x1xf32>
      tpu.vector_store %arg6[%c0_38, %c0_39], %67 {strides = array<i32>} : memref<9x1xf32, #tpu.memory_space<vmem>>, vector<9x1xf32>,
      %cst_40 = arith.constant 0.000000e+00 : f32
      %69 = vector.broadcast %cst_40 : f32 to vector<1x1xf32>
      %c0_41 = arith.constant 0 : index
      %c0_42 = arith.constant 0 : index
      %70 = vector.load %arg7[%c0_41, %c0_42] : memref<1x1xf32, #tpu.memory_space<vmem>>, vector<1x1xf32>
      tpu.vector_store %arg7[%c0_41, %c0_42], %69 {strides = array<i32>} : memref<1x1xf32, #tpu.memory_space<vmem>>, vector<1x1xf32>,
    } else {
    }
    %c0 = arith.constant 0 : index
    %c0_1 = arith.constant 0 : index
    %3 = vector.load %arg1[%c0, %c0_1] : memref<9x128xf32, #tpu.memory_space<vmem>>, vector<9x128xf32>
    %c0_2 = arith.constant 0 : index
    %c0_3 = arith.constant 0 : index
    %4 = vector.load %arg2[%c0_2, %c0_3] : memref<1x128xi32, #tpu.memory_space<vmem>>, vector<1x128xi32>
    %c0_i32_4 = arith.constant 0 : i32
    %5 = vector.broadcast %c0_i32_4 : i32 to vector<1x128xi32>
    %6 = arith.cmpi sge, %4, %5 : vector<1x128xi32>
    %7 = arith.extui %6 : vector<1x128xi1> to vector<1x128xi32>
    %8 = arith.sitofp %7 : vector<1x128xi32> to vector<1x128xf32>
    %9 = tpu.iota {dimensions = array<i32: 0>} : vector<9x128xi32>
    %10 = vector.broadcast %4 : vector<1x128xi32> to vector<9x128xi32>
    %11 = arith.cmpi eq, %9, %10 : vector<9x128xi32>
    %12 = arith.extui %11 : vector<9x128xi1> to vector<9x128xi32>
    %13 = arith.sitofp %12 : vector<9x128xi32> to vector<9x128xf32>
    %cst = arith.constant dense<0xFF800000> : vector<128xf32>
    %14 = vector.multi_reduction <maximumf>, %3, %cst [0] : vector<9x128xf32> to vector<128xf32>
    %15 = vector.shape_cast %14 : vector<128xf32> to vector<1x128xf32>
    %16 = vector.broadcast %15 : vector<1x128xf32> to vector<9x128xf32>
    %17 = arith.subf %3, %16 : vector<9x128xf32>
    %18 = math.exp %17 : vector<9x128xf32>
    %cst_5 = arith.constant dense<0.000000e+00> : vector<128xf32>
    %19 = vector.multi_reduction <add>, %18, %cst_5 [0] : vector<9x128xf32> to vector<128xf32>
    %20 = vector.shape_cast %19 : vector<128xf32> to vector<1x128xf32>
    %21 = tpu.reciprocal %20 : vector<1x128xf32> -> vector<1x128xf32>
    %22 = vector.broadcast %21 : vector<1x128xf32> to vector<9x128xf32>
    %23 = arith.mulf %18, %22 : vector<9x128xf32>
    %c0_6 = arith.constant 0 : index
    %c0_7 = arith.constant 0 : index
    %24 = vector.load %arg4[%c0_6, %c0_7] : memref<9x1xf32, #tpu.memory_space<vmem>>, vector<9x1xf32>
    %25 = arith.mulf %13, %23 : vector<9x128xf32>
    %cst_8 = arith.constant dense<0.000000e+00> : vector<9xf32>
    %26 = vector.multi_reduction <add>, %25, %cst_8 [1] : vector<9x128xf32> to vector<9xf32>
    %27 = vector.shape_cast %26 : vector<9xf32> to vector<9x1xf32>
    %28 = arith.addf %24, %27 : vector<9x1xf32>
    %c0_9 = arith.constant 0 : index
    %c0_10 = arith.constant 0 : index
    %29 = vector.load %arg4[%c0_9, %c0_10] : memref<9x1xf32, #tpu.memory_space<vmem>>, vector<9x1xf32>
    tpu.vector_store %arg4[%c0_9, %c0_10], %28 {strides = array<i32>} : memref<9x1xf32, #tpu.memory_space<vmem>>, vector<9x1xf32>,
    %c0_11 = arith.constant 0 : index
    %c0_12 = arith.constant 0 : index
    %30 = vector.load %arg5[%c0_11, %c0_12] : memref<9x1xf32, #tpu.memory_space<vmem>>, vector<9x1xf32>
    %31 = vector.broadcast %8 : vector<1x128xf32> to vector<9x128xf32>
    %32 = arith.mulf %23, %31 : vector<9x128xf32>
    %cst_13 = arith.constant dense<0.000000e+00> : vector<9xf32>
    %33 = vector.multi_reduction <add>, %32, %cst_13 [1] : vector<9x128xf32> to vector<9xf32>
    %34 = vector.shape_cast %33 : vector<9xf32> to vector<9x1xf32>
    %35 = arith.addf %30, %34 : vector<9x1xf32>
    %c0_14 = arith.constant 0 : index
    %c0_15 = arith.constant 0 : index
    %36 = vector.load %arg5[%c0_14, %c0_15] : memref<9x1xf32, #tpu.memory_space<vmem>>, vector<9x1xf32>
    tpu.vector_store %arg5[%c0_14, %c0_15], %35 {strides = array<i32>} : memref<9x1xf32, #tpu.memory_space<vmem>>, vector<9x1xf32>,
    %c0_16 = arith.constant 0 : index
    %c0_17 = arith.constant 0 : index
    %37 = vector.load %arg6[%c0_16, %c0_17] : memref<9x1xf32, #tpu.memory_space<vmem>>, vector<9x1xf32>
    %cst_18 = arith.constant dense<0.000000e+00> : vector<9xf32>
    %38 = vector.multi_reduction <add>, %13, %cst_18 [1] : vector<9x128xf32> to vector<9xf32>
    %39 = vector.shape_cast %38 : vector<9xf32> to vector<9x1xf32>
    %40 = arith.addf %37, %39 : vector<9x1xf32>
    %c0_19 = arith.constant 0 : index
    %c0_20 = arith.constant 0 : index
    %41 = vector.load %arg6[%c0_19, %c0_20] : memref<9x1xf32, #tpu.memory_space<vmem>>, vector<9x1xf32>
    tpu.vector_store %arg6[%c0_19, %c0_20], %40 {strides = array<i32>} : memref<9x1xf32, #tpu.memory_space<vmem>>, vector<9x1xf32>,
    %42 = arith.mulf %17, %13 : vector<9x128xf32>
    %cst_21 = arith.constant dense<0.000000e+00> : vector<128xf32>
    %43 = vector.multi_reduction <add>, %42, %cst_21 [0] : vector<9x128xf32> to vector<128xf32>
    %44 = vector.shape_cast %43 : vector<128xf32> to vector<1x128xf32>
    %45 = math.log %20 : vector<1x128xf32>
    %46 = arith.subf %44, %45 : vector<1x128xf32>
    %47 = arith.mulf %23, %13 : vector<9x128xf32>
    %cst_22 = arith.constant dense<0.000000e+00> : vector<128xf32>
    %48 = vector.multi_reduction <add>, %47, %cst_22 [0] : vector<9x128xf32> to vector<128xf32>
    %49 = vector.shape_cast %48 : vector<128xf32> to vector<1x128xf32>
    %cst_23 = arith.constant 1.000000e+00 : f32
    %50 = vector.broadcast %cst_23 : f32 to vector<1x128xf32>
    %51 = arith.subf %50, %49 : vector<1x128xf32>
    %52 = arith.mulf %51, %51 : vector<1x128xf32>
    %c0_24 = arith.constant 0 : index
    %c0_25 = arith.constant 0 : index
    %53 = vector.load %arg7[%c0_24, %c0_25] : memref<1x1xf32, #tpu.memory_space<vmem>>, vector<1x1xf32>
    %54 = arith.mulf %52, %46 : vector<1x128xf32>
    %55 = arith.mulf %54, %8 : vector<1x128xf32>
    %cst_26 = arith.constant dense<0.000000e+00> : vector<1xf32>
    %56 = vector.multi_reduction <add>, %55, %cst_26 [1] : vector<1x128xf32> to vector<1xf32>
    %57 = vector.shape_cast %56 : vector<1xf32> to vector<1x1xf32>
    %58 = arith.addf %53, %57 : vector<1x1xf32>
    %c0_27 = arith.constant 0 : index
    %c0_28 = arith.constant 0 : index
    %59 = vector.load %arg7[%c0_27, %c0_28] : memref<1x1xf32, #tpu.memory_space<vmem>>, vector<1x1xf32>
    tpu.vector_store %arg7[%c0_27, %c0_28], %58 {strides = array<i32>} : memref<1x1xf32, #tpu.memory_space<vmem>>, vector<1x1xf32>,
    %c0_i32_29 = arith.constant 0 : i32
    %60 = arith.cmpi eq, %arg0, %c0_i32_29 : i32
    %61 = arith.extui %60 : i1 to i32
    %c0_i32_30 = arith.constant 0 : i32
    %62 = arith.cmpi ne, %61, %c0_i32_30 : i32
    scf.if %62 {
      %c0_31 = arith.constant 0 : index
      %c0_32 = arith.constant 0 : index
      %63 = vector.load %arg4[%c0_31, %c0_32] : memref<9x1xf32, #tpu.memory_space<vmem>>, vector<9x1xf32>
      %c0_33 = arith.constant 0 : index
      %c0_34 = arith.constant 0 : index
      %64 = vector.load %arg5[%c0_33, %c0_34] : memref<9x1xf32, #tpu.memory_space<vmem>>, vector<9x1xf32>
      %65 = arith.subf %64, %63 : vector<9x1xf32>
      %c0_35 = arith.constant 0 : index
      %c0_36 = arith.constant 0 : index
      %66 = vector.load %arg6[%c0_35, %c0_36] : memref<9x1xf32, #tpu.memory_space<vmem>>, vector<9x1xf32>
      %67 = arith.subf %66, %63 : vector<9x1xf32>
      %68 = arith.addf %63, %65 : vector<9x1xf32>
      %cst_37 = arith.constant 1.000000e-07 : f32
      %69 = vector.broadcast %cst_37 : f32 to vector<9x1xf32>
      %70 = arith.addf %68, %69 : vector<9x1xf32>
      %71 = arith.divf %63, %70 : vector<9x1xf32>
      %72 = arith.addf %63, %67 : vector<9x1xf32>
      %cst_38 = arith.constant 1.000000e-07 : f32
      %73 = vector.broadcast %cst_38 : f32 to vector<9x1xf32>
      %74 = arith.addf %72, %73 : vector<9x1xf32>
      %75 = arith.divf %63, %74 : vector<9x1xf32>
      %76 = arith.mulf %71, %75 : vector<9x1xf32>
      %cst_39 = arith.constant 2.000000e+00 : f32
      %77 = vector.broadcast %cst_39 : f32 to vector<9x1xf32>
      %78 = arith.mulf %77, %76 : vector<9x1xf32>
      %79 = arith.addf %71, %75 : vector<9x1xf32>
      %cst_40 = arith.constant 1.000000e-07 : f32
      %80 = vector.broadcast %cst_40 : f32 to vector<9x1xf32>
      %81 = arith.addf %79, %80 : vector<9x1xf32>
      %82 = arith.divf %78, %81 : vector<9x1xf32>
      %cst_41 = arith.constant 1.000000e-07 : f32
      %cst_42 = arith.constant 0.99999988 : f32
      %83 = vector.broadcast %cst_41 : f32 to vector<9x1xf32>
      %84 = arith.maximumf %83, %82 : vector<9x1xf32>
      %85 = vector.broadcast %cst_42 : f32 to vector<9x1xf32>
      %86 = arith.minimumf %85, %84 : vector<9x1xf32>
      %cst_43 = arith.constant dense<0.000000e+00> : vector<1xf32>
      %87 = vector.multi_reduction <add>, %86, %cst_43 [0] : vector<9x1xf32> to vector<1xf32>
      %88 = vector.shape_cast %87 : vector<1xf32> to vector<1x1xf32>
      %cst_44 = arith.constant 9.000000e+00 : f32
      %89 = vector.broadcast %cst_44 : f32 to vector<1x1xf32>
      %90 = arith.divf %88, %89 : vector<1x1xf32>
      %cst_45 = arith.constant 1.000000e+00 : f32
      %91 = vector.broadcast %cst_45 : f32 to vector<1x1xf32>
      %92 = arith.subf %91, %90 : vector<1x1xf32>
      %c0_46 = arith.constant 0 : index
      %c0_47 = arith.constant 0 : index
      %93 = vector.load %arg7[%c0_46, %c0_47] : memref<1x1xf32, #tpu.memory_space<vmem>>, vector<1x1xf32>
      %cst_48 = arith.constant 0.000000e+00 : f32
      %94 = vector.broadcast %cst_48 : f32 to vector<1x1xf32>
      %95 = arith.subf %94, %93 : vector<1x1xf32>
      %cst_49 = arith.constant 8.000000e+00 : f32
      %96 = vector.broadcast %cst_49 : f32 to vector<1x1xf32>
      %97 = arith.divf %95, %96 : vector<1x1xf32>
      %cst_50 = arith.constant 4.000000e-01 : f32
      %98 = vector.broadcast %cst_50 : f32 to vector<1x1xf32>
      %99 = arith.mulf %92, %98 : vector<1x1xf32>
      %cst_51 = arith.constant 6.000000e-01 : f32
      %100 = vector.broadcast %cst_51 : f32 to vector<1x1xf32>
      %101 = arith.mulf %97, %100 : vector<1x1xf32>
      %102 = arith.addf %99, %101 : vector<1x1xf32>
      %c0_52 = arith.constant 0 : index
      %c0_53 = arith.constant 0 : index
      %103 = vector.load %arg3[%c0_52, %c0_53] : memref<1x1xf32, #tpu.memory_space<vmem>>, vector<1x1xf32>
      tpu.vector_store %arg3[%c0_52, %c0_53], %102 {strides = array<i32>} : memref<1x1xf32, #tpu.memory_space<vmem>>, vector<1x1xf32>,
    } else {
    }
    return
  }
  func.func @transform_0(%arg0: i32) -> (i32, i32) {
    %c0_i32 = arith.constant 0 : i32
    %c0_i32_0 = arith.constant 0 : i32
    return %c0_i32, %arg0 : i32, i32
  }
  func.func @transform_1(%arg0: i32) -> (i32, i32) {
    %c0_i32 = arith.constant 0 : i32
    %c0_i32_0 = arith.constant 0 : i32
    return %c0_i32, %arg0 : i32, i32
  }
  func.func @transform_2(%arg0: i32) -> (i32, i32) {
    %c0_i32 = arith.constant 0 : i32
    %c0_i32_0 = arith.constant 0 : i32
    %c0_i32_1 = arith.constant 0 : i32
    return %c0_i32, %c0_i32_0 : i32, i32
  }
}

</mosaic_0001>

<llo_original>
// kernel: tpu_custom_call.1
$region0: #{tpu_custom_call.1}
  #allocation0 [shape = 'u32[]', space=smem, size = 0x4, offset = 0x4, fixed_abs, tag = 'smem constant byte address 0x4 - core index']
  #allocation1 [shape = 'u32[144,128]{1,0:T(1,128)}', space=vmem, size = 0x12000, scoped, tag = 'internal scratch']
  #allocation2 [shape = 'f32[9,1]{1,0:T(8,128)}', space=vmem, size = 0x2000, scoped, tag = 'scratch operand']
  #allocation3 [shape = 'f32[9,1]{1,0:T(8,128)}', space=vmem, size = 0x2000, scoped, tag = 'scratch operand']
  #allocation4 [shape = 'f32[9,1]{1,0:T(8,128)}', space=vmem, size = 0x2000, scoped, tag = 'scratch operand']
  #allocation5 [shape = 'f32[1,1]{1,0:T(1,128)}', space=vmem, size = 0x200, scoped, tag = 'scratch operand']
  %s0 = inlined_call_operand.hbm [shape: f32[9,128], index: 0, kind: input, shape index: {}]
  %s1 = inlined_call_operand.vmem [shape: s32[1,128], index: 1, kind: input, shape index: {}]
  %s2 = inlined_call_operand.hbm [shape: f32[1,1], index: 2, kind: output, shape index: {}]
  %s3 = sld [smem:[#allocation0]]
  $region30: #{tpu_custom_call.1} parent=0
    _
  %s5 = ssub.s32 1, %s3
  %s6 = scalar_select 0, %s5, %s3
  $region1: #{tpu_custom_call.1} parent=0
    #allocation6 [shape = 'u8[8192]{0}', space=vmem, size = 0x2000, scoped, tag = 'input window, operand 0, single buffered']
    #allocation7 [shape = 's32[1]{0}', space=sflag, size = 0x4, scoped, tag = 'scoped memory for tpu_custom_call.1']
    #allocation8 [shape = 's32[1]{0}', space=sflag, size = 0x4, scoped, tag = 'scoped memory for tpu_custom_call.1']
    #allocation9 [shape = 'u8[512]{0}', space=vmem, size = 0x400, scoped, tag = 'output window, operand 0, single buffered']
    %7 = vsyncpa [#allocation7], 0
    %8 = vsyncpa [#allocation8], 0
    // Predicated region
    $region2: #{tpu_custom_call.1} parent=1 // pred_check
      _
    $region3: #{tpu_custom_call.1} parent=1 // pred_check_branch
      %10 = sbr.rel (0) target = $region5
    $region4: #{tpu_custom_call.1} parent=1 // pred_region
      %s12 = ssub.s32 256, 256
      %13 = vsyncadd [#allocation7], %s12
      %s14 = sshll.u32 [#allocation6], 4
      %s15 = int_to_ptr.vmem [resolvable:$true] %s14
      %20 = dma.hbm_to_vmem [thread:$0]  %s0, 256, %s15, [#allocation7], 128, 128, 8
    $region5: #{tpu_custom_call.1} parent=1 // pred_fallthru
      _
    // Predicated region
    $region6: #{tpu_custom_call.1} parent=1 // pred_check
      _
    $region7: #{tpu_custom_call.1} parent=1 // pred_check_branch
      %22 = sbr.rel (0) target = $region9
    $region8: #{tpu_custom_call.1} parent=1 // pred_region
      _
    $region9: #{tpu_custom_call.1} parent=1 // pred_fallthru
      _
    // Predicated region
    $region10: #{tpu_custom_call.1} parent=1 // pred_check
      _
    $region11: #{tpu_custom_call.1} parent=1 // pred_check_branch
      %24 = sbr.rel (0) target = $region13
    $region12: #{tpu_custom_call.1} parent=1 // pred_region
      %25 = dma.done [#allocation7], 256
    $region13: #{tpu_custom_call.1} parent=1 // pred_fallthru
      _
    %p26 = scmp.eq.s32.totalorder 0, 0
    // Predicated region
    $region14: #{tpu_custom_call.1} parent=1 // pred_check
      %p27 = pneg %p26
    $region15: #{tpu_custom_call.1} parent=1 // pred_check_branch
      %29 = sbr.rel (%p27) target = $region17
    $region16: #{tpu_custom_call.1} parent=1 // pred_region
      %vm30 = vcmask 7168
      %31 = vst.msk [vmem:[#allocation2] sm:$0xff] %vm30, 0.0
      %vm32 = vcmask 0
      %33 = vst.msk [vmem:[#allocation2 + $0x8] sm:$0x1] %vm32, 0.0
      %34 = vst.msk [vmem:[#allocation3] sm:$0xff] %vm30, 0.0
      %35 = vst.msk [vmem:[#allocation3 + $0x8] sm:$0x1] %vm32, 0.0
      %36 = vst.msk [vmem:[#allocation4] sm:$0xff] %vm30, 0.0
      %37 = vst.msk [vmem:[#allocation4 + $0x8] sm:$0x1] %vm32, 0.0
      %38 = vst.msk [vmem:[#allocation5] sm:$0x1] %vm32, 0.0
    $region17: #{tpu_custom_call.1} parent=1 // pred_fallthru
      _
    %v39 = vld [vmem:[#allocation6] sm:$0xff]
    %v40 = vld [vmem:[#allocation6 + $0x8] sm:$0x1]
    %v41 = vld [vmem:[%s1] sm:$0x1]
    %vm42 = vcmp.ge.s32.totalorder %v41, 0
    %v43 = vsel %vm42, 1, 0
    %v44 = vcvt.s32.f32 %v43
    %v45 = vlaneseq
    %v46 = vshrl.u32 %v45, 7
    %v47 = vadd.s32 %v46, 8
    %v48 = vlaneseq
    %v49 = vshrl.u32 %v48, 7
    %v50 = vsub.s32 0, %v49
    %v51 = vrot.slane %v41, %v50
    %vm52 = vcmp.eq.s32.totalorder %v46, %v51
    %vm53 = vcmp.eq.s32.totalorder %v47, %v51
    %v54 = vsel %vm52, 1, 0
    %v55 = vsel %vm53, 1, 0
    %v56 = vcvt.s32.f32 %v54
    %v57 = vcvt.s32.f32 %v55
    %vm58 = vcmask 1040384
    %v59 = vsel %vm58, %v40, -inf
    %v60 = vmax.f32 %v39, %v59
    %v61 = vrot.slane %v60, 4
    %v62 = vmax.f32 %v60, %v61
    %v63 = vrot.slane %v62, 2
    %v64 = vmax.f32 %v62, %v63
    %v65 = vrot.slane %v64, 1
    %v66 = vmax.f32 %v64, %v65
    %v67 = vsub.f32 %v39, %v66
    %v68 = vsub.f32 %v40, %v66
    %v69 = vmul.f32 %v67, 1.442695
    %v70 = vpow.pop %v69
    %v71 = vmul.f32 %v68, 1.442695
    %v72 = vpow.pop %v71
    %v73 = vsel %vm58, %v72, 0.0
    %v74 = vadd.f32 %v70, %v73
    %v75 = vrot.slane %v74, 4
    %v76 = vadd.f32 %v74, %v75
    %v77 = vrot.slane %v76, 2
    %v78 = vadd.f32 %v76, %v77
    %v79 = vrot.slane %v78, 1
    %v80 = vadd.f32 %v78, %v79
    %v81 = vrcp.pop %v80
    %v82 = vmul.f32 %v70, %v81
    %v83 = vmul.f32 %v72, %v81
    %v84 = vld [vmem:[#allocation2] sm:$0xff]
    %v85 = vld [vmem:[#allocation2 + $0x8] sm:$0x1]
    %v86 = vmul.f32 %v56, %v82
    %v87 = vmul.f32 %v57, %v83
    %88 = vadd.xlane.f32.xlu0 %v86
    %v89 = vpop.xlane.xlu0 %88
    %v90 = vsel %vm58, %v87, 0.0
    %91 = vadd.xlane.f32.xlu0 %v90
    %v92 = vpop.xlane.xlu0 %91
    %v93 = vadd.f32 %v84, %v89
    %v94 = vadd.f32 %v85, %v92
    %vm95 = vcmask 7168
    %96 = vst.msk [vmem:[#allocation2] sm:$0xff] %vm95, %v93
    %vm97 = vcmask 0
    %98 = vst.msk [vmem:[#allocation2 + $0x8] sm:$0x1] %vm97, %v94
    %v99 = vld [vmem:[#allocation3] sm:$0xff]
    %v100 = vld [vmem:[#allocation3 + $0x8] sm:$0x1]
    %v102 = vlaneseq
    %v103 = vshrl.u32 %v102, 7
    %v104 = vsub.s32 0, %v103
    %v105 = vrot.slane %v44, %v104
    %v107 = vmul.f32 %v82, %v105
    %v108 = vmul.f32 %v83, %v105
    %109 = vadd.xlane.f32.xlu0 %v107
    %v110 = vpop.xlane.xlu0 %109
    %v111 = vsel %vm58, %v108, 0.0
    %112 = vadd.xlane.f32.xlu0 %v111
    %v113 = vpop.xlane.xlu0 %112
    %v114 = vadd.f32 %v99, %v110
    %v115 = vadd.f32 %v100, %v113
    %116 = vst.msk [vmem:[#allocation3] sm:$0xff] %vm95, %v114
    %117 = vst.msk [vmem:[#allocation3 + $0x8] sm:$0x1] %vm97, %v115
    %v118 = vld [vmem:[#allocation4] sm:$0xff]
    %v119 = vld [vmem:[#allocation4 + $0x8] sm:$0x1]
    %120 = vadd.xlane.f32.xlu0 %v56
    %v121 = vpop.xlane.xlu0 %120
    %v122 = vsel %vm58, %v57, 0.0
    %123 = vadd.xlane.f32.xlu0 %v122
    %v124 = vpop.xlane.xlu0 %123
    %v125 = vadd.f32 %v118, %v121
    %v126 = vadd.f32 %v119, %v124
    %127 = vst.msk [vmem:[#allocation4] sm:$0xff] %vm95, %v125
    %128 = vst.msk [vmem:[#allocation4 + $0x8] sm:$0x1] %vm97, %v126
    %v129 = vmul.f32 %v67, %v56
    %v130 = vmul.f32 %v68, %v57
    %v131 = vsel %vm58, %v130, 0.0
    %v132 = vadd.f32 %v129, %v131
    %v133 = vrot.slane %v132, 4
    %v134 = vadd.f32 %v132, %v133
    %v135 = vrot.slane %v134, 2
    %v136 = vadd.f32 %v134, %v135
    %v137 = vrot.slane %v136, 1
    %v138 = vadd.f32 %v136, %v137
    %v139 = vlog2.pop %v80
    %v140 = vmul.f32 %v139, 0.6931472
    %v141 = vsub.f32 %v138, %v140
    %v142 = vadd.f32 %v86, %v90
    %v143 = vrot.slane %v142, 4
    %v144 = vadd.f32 %v142, %v143
    %v145 = vrot.slane %v144, 2
    %v146 = vadd.f32 %v144, %v145
    %v147 = vrot.slane %v146, 1
    %v148 = vadd.f32 %v146, %v147
    %v149 = vsub.f32 1.0, %v148
    %v150 = vmul.f32 %v149, %v149
    %v151 = vld [vmem:[#allocation5] sm:$0x1]
    %v152 = vmul.f32 %v150, %v141
    %v153 = vmul.f32 %v152, %v44
    %v154 = vsel %vm58, %v153, 0.0
    %155 = vadd.xlane.f32.xlu0 %v154
    %v156 = vpop.xlane.xlu0 %155
    %v157 = vadd.f32 %v151, %v156
    %158 = vst.msk [vmem:[#allocation5] sm:$0x1] %vm97, %v157
    // Predicated region
    $region18: #{tpu_custom_call.1} parent=1 // pred_check
      %p159 = pneg %p26
    $region19: #{tpu_custom_call.1} parent=1 // pred_check_branch
      %161 = sbr.rel (%p159) target = $region21
    $region20: #{tpu_custom_call.1} parent=1 // pred_region
      %v162 = vld [vmem:[#allocation2] sm:$0xff]
      %v163 = vld [vmem:[#allocation2 + $0x8] sm:$0x1]
      %v164 = vld [vmem:[#allocation3] sm:$0xff]
      %v165 = vld [vmem:[#allocation3 + $0x8] sm:$0x1]
      %v166 = vsub.f32 %v164, %v162
      %v167 = vsub.f32 %v165, %v163
      %v168 = vld [vmem:[#allocation4] sm:$0xff]
      %v169 = vld [vmem:[#allocation4 + $0x8] sm:$0x1]
      %v170 = vsub.f32 %v168, %v162
      %v171 = vsub.f32 %v169, %v163
      %v172 = vadd.f32 %v162, %v166
      %v173 = vadd.f32 %v163, %v167
      %v174 = vadd.f32 %v172, 1e-07
      %v175 = vadd.f32 %v173, 1e-07
      %v176 = vrcp.pop %v174
      %v177 = vmul.f32 %v162, %v176
      %v178 = vrcp.pop %v175
      %v179 = vmul.f32 %v163, %v178
      %v180 = vadd.f32 %v162, %v170
      %v181 = vadd.f32 %v163, %v171
      %v182 = vadd.f32 %v180, 1e-07
      %v183 = vadd.f32 %v181, 1e-07
      %v184 = vrcp.pop %v182
      %v185 = vmul.f32 %v162, %v184
      %v186 = vrcp.pop %v183
      %v187 = vmul.f32 %v163, %v186
      %v188 = vmul.f32 %v177, %v185
      %v189 = vmul.f32 %v179, %v187
      %v190 = vmul.f32 %v188, 2.0
      %v191 = vmul.f32 %v189, 2.0
      %v192 = vadd.f32 %v177, %v185
      %v193 = vadd.f32 %v179, %v187
      %v194 = vadd.f32 %v192, 1e-07
      %v195 = vadd.f32 %v193, 1e-07
      %v196 = vrcp.pop %v194
      %v197 = vmul.f32 %v190, %v196
      %v198 = vrcp.pop %v195
      %v199 = vmul.f32 %v191, %v198
      %v200 = vmax.f32 %v197, 1e-07
      %v201 = vmax.f32 %v199, 1e-07
      %v202 = vmin.f32 %v200, 0.9999999
      %v203 = vmin.f32 %v201, 0.9999999
      %v204 = vsel %vm95, %v202, 0.0
      %v205 = vsel %vm97, %v203, 0.0
      %v206 = vadd.f32 %v204, %v205
      %v207 = vrot.slane %v206, 4
      %v208 = vadd.f32 %v206, %v207
      %v209 = vrot.slane %v208, 2
      %v210 = vadd.f32 %v208, %v209
      %v211 = vrot.slane %v210, 1
      %v212 = vadd.f32 %v210, %v211
      %v213 = vrcp.pop 9.0
      %v214 = vmul.f32 %v212, %v213
      %v215 = vsub.f32 1.0, %v214
      %v216 = vld [vmem:[#allocation5] sm:$0x1]
      %v217 = vsub.f32 0.0, %v216
      %v218 = vrcp.pop 8.0
      %v219 = vmul.f32 %v217, %v218
      %v220 = vmul.f32 %v215, 0.4
      %v221 = vmul.f32 %v219, 0.6
      %v222 = vadd.f32 %v220, %v221
      %223 = vst.msk [vmem:[#allocation9] sm:$0x1] %vm97, %v222
    $region21: #{tpu_custom_call.1} parent=1 // pred_fallthru
      _
    // Predicated region
    $region22: #{tpu_custom_call.1} parent=1 // pred_check
      _
    $region23: #{tpu_custom_call.1} parent=1 // pred_check_branch
      %225 = sbr.rel (0) target = $region25
    $region24: #{tpu_custom_call.1} parent=1 // pred_region
      %s227 = ssub.s32 16, 16
      %228 = vsyncadd [#allocation8], %s227
      %s230 = sshll.u32 [#allocation9], 4
      %s231 = int_to_ptr.vmem [resolvable:$true] %s230
      %233 = dma.vmem_to_hbm [thread:$0]  %s231, 16, %s2, [#allocation8]
    $region25: #{tpu_custom_call.1} parent=1 // pred_fallthru
      _
    // Predicated region
    $region26: #{tpu_custom_call.1} parent=1 // pred_check
      _
    $region27: #{tpu_custom_call.1} parent=1 // pred_check_branch
      %235 = sbr.rel (0) target = $region29
    $region28: #{tpu_custom_call.1} parent=1 // pred_region
      %236 = dma.done [#allocation8], 16
    $region29: #{tpu_custom_call.1} parent=1 // pred_fallthru
      _
    %237 = vsyncpa [#allocation7], 1
    %238 = vsyncpa [#allocation8], 1

</llo_original>
